<compile_context>
chip_gen: v7x
topology: tpu7x:2x2x1
jax: 0.10.0
libtpu: 0.0.40
codegen_flags: <defaults>
</compile_context>

<pallas_src>
import functools

import jax
import jax.numpy as jnp
from jax.experimental import pallas as pl
from jax.experimental.pallas import tpu as pltpu

LANES = 128
CHUNK_ROWS = 512        # rows per in-kernel compute chunk (256 KiB f32 working set)
MAX_BLOCK_ROWS = 8192   # rows per DMA block (4 MiB f32 per input)


def _cdiv(a, b):
    return -(-a // b)


def _round_up(a, b):
    return _cdiv(a, b) * b


def _num_tensorcores():
    """2 TensorCores per chip on v7x-class devices; 1 on v5e/v6e (and older)."""
    try:
        kind = jax.devices()[0].device_kind.lower()
    except Exception:
        return 1
    return 2 if "7" in kind else 1


def _focal_loss_kernel(x_ref, t_ref, bce_out_ref, af_out_ref, *,
                       gamma, alpha, n_cores, total_blocks, block_rows,
                       chunk_rows, n_valid, need_mask, need_skip_guard):
    c = pl.program_id(0)
    i = pl.program_id(1)

    # The (8,128) output blocks double as accumulators: their index_map is constant over
    # the inner grid axis, so they stay VMEM-resident until this core finishes.
    @pl.when(i == 0)
    def _init():
        bce_out_ref[...] = jnp.zeros_like(bce_out_ref)
        af_out_ref[...] = jnp.zeros_like(af_out_ref)

    raw_blk = i * n_cores + c
    n_chunks = block_rows // chunk_rows
    sub = chunk_rows // 8

    def _compute_block():
        if need_mask:
            # Flat element index within one chunk; hoisted out of the chunk loop
            # (broadcast_in_dim is not CSE'd by JAX).
            row_iota = jax.lax.broadcasted_iota(jnp.int32, (chunk_rows, LANES), 0)
            lane_iota = jax.lax.broadcasted_iota(jnp.int32, (chunk_rows, LANES), 1)
            chunk_idx = row_iota * LANES + lane_iota

        def chunk_body(k):
            start = k * chunk_rows
            if not isinstance(start, int):
                start = pl.multiple_of(start, chunk_rows)
            x = x_ref[pl.ds(start, chunk_rows), :].astype(jnp.float32)
            t = t_ref[pl.ds(start, chunk_rows), :].astype(jnp.float32)

            # One exp(-|x|), reused by the stable BCE-with-logits and the sigmoid.
            e = jnp.exp(-jnp.abs(x))
            # Numerically stable BCEWithLogits: max(x,0) - x*t + log1p(exp(-|x|))
            bce = jnp.maximum(x, 0.0) - x * t + jnp.log1p(e)

            # sigmoid(x): EUP approx reciprocal + one Newton step (~f32-exact, cheap VALU).
            d = 1.0 + e
            r = pl.reciprocal(d, approx=True)
            r = r * (2.0 - d * r)
            p = jnp.where(x >= 0.0, r, e * r)

            q = p + t - 2.0 * p * t                          # = 1 - p_t
            alpha_t = (1.0 - alpha) + (2.0 * alpha - 1.0) * t
            if gamma == 2.0:
                focal = q * q
            elif gamma == 1.0:
                focal = q
            else:
                # Generic pow (exp(gamma*log(q))); q in (0,1) for finite logits.
                focal = q ** gamma
            af = alpha_t * focal

            if need_mask:
                elem = (raw_blk * block_rows + k * chunk_rows) * LANES + chunk_idx
                valid = elem < n_valid
                bce = jnp.where(valid, bce, 0.0)
                af = jnp.where(valid, af, 0.0)

            # Fold each chunk down to (8,128): pure per-vreg VPU adds, no cross-lane work.
            bce_out_ref[...] += jnp.sum(bce.reshape(sub, 8, LANES), axis=0)
            af_out_ref[...] += jnp.sum(af.reshape(sub, 8, LANES), axis=0)

        if n_chunks == 1:
            chunk_body(0)
        else:
            def _loop_body(k, carry):
                chunk_body(k)
                return carry
            jax.lax.fori_loop(0, n_chunks, _loop_body, 0)

    if need_skip_guard:
        # Round-robin block assignment can hand the last core a clamped duplicate block
        # when total_blocks % n_cores != 0; skip its contribution entirely.
        pl.when(raw_blk < total_blocks)(_compute_block)
    else:
        _compute_block()


def focal_loss(logits, targets, *, gamma=2.0, alpha=0.25):
    """Pallas TPU implementation of FocalLoss.forward (pos_weight=None)."""
    x = jnp.ravel(logits)
    t = jnp.ravel(targets)
    # Stream native 16/32-bit floating dtypes; everything else is cast up front.
    if not jnp.issubdtype(x.dtype, jnp.floating) or x.dtype.itemsize > 4:
        x = x.astype(jnp.float32)
    if not jnp.issubdtype(t.dtype, jnp.floating) or t.dtype.itemsize > 4:
        t = t.astype(jnp.float32)

    n_valid = int(x.shape[0])
    # Sublane granule: 8 rows for 4-byte dtypes, 16 for 2-byte (sublane-packed).
    granule_rows = 32 // min(x.dtype.itemsize, t.dtype.itemsize)
    granule_elems = granule_rows * LANES
    pad = (-n_valid) % granule_elems
    if pad:
        # Only when the flat size is not a multiple of one (granule x 128) tile; all
        # block/grid-level misalignment is masked in-kernel (no HBM round trip).
        x = jnp.pad(x, (0, pad))
        t = jnp.pad(t, (0, pad))
    rows = (n_valid + pad) // LANES

    n_cores = _num_tensorcores()
    if rows <= CHUNK_ROWS:
        chunk_rows = rows
        block_rows = rows
    else:
        chunk_rows = CHUNK_ROWS
        per_core = _round_up(_cdiv(rows, n_cores), chunk_rows)
        block_rows = min(MAX_BLOCK_ROWS, per_core, (rows // chunk_rows) * chunk_rows)
    total_blocks = _cdiv(rows, block_rows)
    n_cores = max(1, min(n_cores, total_blocks))
    n_inner = _cdiv(total_blocks, n_cores)
    need_skip_guard = (n_cores * n_inner) != total_blocks
    need_mask = (total_blocks * block_rows * LANES) != n_valid

    x2d = x.reshape(rows, LANES)
    t2d = t.reshape(rows, LANES)

    if need_skip_guard:
        def in_map(c, i):
            return (jnp.minimum(i * n_cores + c, total_blocks - 1), 0)
    else:
        def in_map(c, i):
            return (i * n_cores + c, 0)

    kernel = functools.partial(
        _focal_loss_kernel, gamma=gamma, alpha=alpha, n_cores=n_cores,
        total_blocks=total_blocks, block_rows=block_rows, chunk_rows=chunk_rows,
        n_valid=n_valid, need_mask=need_mask, need_skip_guard=need_skip_guard)

    # Double-buffered inputs plus headroom for the small chunk-sized intermediates;
    # sized to fit v7x's 64 MiB VMEM while lifting v5e's 16 MiB scoped default.
    in_bytes = 2 * block_rows * LANES * (x2d.dtype.itemsize + t2d.dtype.itemsize)
    vmem_limit = int(min(in_bytes + (24 << 20), 60 << 20))

    processed = total_blocks * block_rows * LANES
    cost = pl.CostEstimate(
        flops=22 * processed,
        transcendentals=3 * processed,
        bytes_accessed=int(x2d.size) * x2d.dtype.itemsize
        + int(t2d.size) * t2d.dtype.itemsize
        + 2 * n_cores * 8 * LANES * 4,
    )

    bce_part, af_part = pl.pallas_call(
        kernel,
        out_shape=(
            jax.ShapeDtypeStruct((n_cores * 8, LANES), jnp.float32),
            jax.ShapeDtypeStruct((n_cores * 8, LANES), jnp.float32),
        ),
        grid_spec=pltpu.PrefetchScalarGridSpec(
            num_scalar_prefetch=0,
            grid=(n_cores, n_inner),
            in_specs=[
                pl.BlockSpec((block_rows, LANES), in_map),
                pl.BlockSpec((block_rows, LANES), in_map),
            ],
            out_specs=[
                pl.BlockSpec((8, LANES), lambda c, i: (c, 0)),
                pl.BlockSpec((8, LANES), lambda c, i: (c, 0)),
            ],
        ),
        compiler_params=pltpu.CompilerParams(
            dimension_semantics=("parallel", "arbitrary"),
            vmem_limit_bytes=vmem_limit,
        ),
        cost_estimate=cost,
    )(x2d, t2d)

    inv_n = 1.0 / float(n_valid)
    bce_mean = jnp.sum(bce_part) * inv_n
    af_mean = jnp.sum(af_part) * inv_n
    # mean(alpha_t * focal * bce_mean) = mean(alpha_t * focal) * bce_mean  (bce is scalar)
    return af_mean * bce_mean


def _focal_loss_ref(logits, targets, *, gamma=2.0, alpha=0.25):
    x = jnp.ravel(logits).astype(jnp.float32)
    t = jnp.ravel(targets).astype(jnp.float32)
    bce = jnp.mean(jnp.maximum(x, 0.0) - x * t + jnp.log1p(jnp.exp(-jnp.abs(x))))
    p = jax.nn.sigmoid(x)
    p_t = p * t + (1 - p) * (1 - t)
    alpha_t = alpha * t + (1 - alpha) * (1 - t)
    focal = (1 - p_t) ** gamma
    return jnp.mean(alpha_t * focal * bce)


if __name__ == "__main__":
    key = jax.random.PRNGKey(0)
    k1, k2, k3, k4 = jax.random.split(key, 4)

    # Small shape consistent with a segmentation-style use of FocalLoss: NCHW logits.
    logits = jax.random.normal(k1, (2, 4, 16, 16), dtype=jnp.float32)
    targets = (jax.random.uniform(k2, (2, 4, 16, 16)) > 0.7).astype(jnp.float32)
    out = focal_loss(logits, targets)
    jax.block_until_ready(out)
    ref = _focal_loss_ref(logits, targets)
    assert jnp.allclose(out, ref, rtol=2e-5, atol=1e-6), (out, ref)

    # Unaligned flat size: exercises the in-kernel element-index masking path.
    logits2 = jax.random.normal(k3, (2, 3, 7, 7), dtype=jnp.float32)
    targets2 = (jax.random.uniform(k4, (2, 3, 7, 7)) > 0.6).astype(jnp.float32)
    out2 = focal_loss(logits2, targets2)
    jax.block_until_ready(out2)
    ref2 = _focal_loss_ref(logits2, targets2)
    assert jnp.allclose(out2, ref2, rtol=2e-5, atol=1e-6), (out2, ref2)

    print("KERNEL_OK")
</pallas_src>

<mosaic_0001>
module attributes {stable_mosaic.version = 11 : i64} {
  func.func @_focal_loss_kernel(%arg0: i32, %arg1: i32, %arg2: memref<16x128xf32, #tpu.memory_space<vmem>>, %arg3: memref<16x128xf32, #tpu.memory_space<vmem>>, %arg4: memref<8x128xf32, #tpu.memory_space<vmem>>, %arg5: memref<8x128xf32, #tpu.memory_space<vmem>>) attributes {dimension_semantics = [#tpu.dimension_semantics<parallel>, #tpu.dimension_semantics<arbitrary>], iteration_bounds = array<i64: 1, 1>, scalar_prefetch = 0 : i64, scratch_operands = 0 : i64, tpu.core_type = #tpu.core_type<tc>, window_params = [{transform_indices = @transform_0, window_bounds = array<i64: 16, 128>}, {transform_indices = @transform_1, window_bounds = array<i64: 16, 128>}, {transform_indices = @transform_2, window_bounds = array<i64: 8, 128>}, {transform_indices = @transform_3, window_bounds = array<i64: 8, 128>}]} {
    %c0_i32 = arith.constant 0 : i32
    %0 = arith.cmpi eq, %arg1, %c0_i32 : i32
    %1 = arith.extui %0 : i1 to i32
    %c0_i32_0 = arith.constant 0 : i32
    %2 = arith.cmpi ne, %1, %c0_i32_0 : i32
    scf.if %2 {
      %cst_21 = arith.constant 0.000000e+00 : f32
      %47 = vector.broadcast %cst_21 : f32 to vector<8x128xf32>
      %c0_22 = arith.constant 0 : index
      %c0_23 = arith.constant 0 : index
      %48 = vector.load %arg4[%c0_22, %c0_23] : memref<8x128xf32, #tpu.memory_space<vmem>>, vector<8x128xf32>
      tpu.vector_store %arg4[%c0_22, %c0_23], %47 {strides = array<i32>} : memref<8x128xf32, #tpu.memory_space<vmem>>, vector<8x128xf32>,
      %cst_24 = arith.constant 0.000000e+00 : f32
      %49 = vector.broadcast %cst_24 : f32 to vector<8x128xf32>
      %c0_25 = arith.constant 0 : index
      %c0_26 = arith.constant 0 : index
      %50 = vector.load %arg5[%c0_25, %c0_26] : memref<8x128xf32, #tpu.memory_space<vmem>>, vector<8x128xf32>
      tpu.vector_store %arg5[%c0_25, %c0_26], %49 {strides = array<i32>} : memref<8x128xf32, #tpu.memory_space<vmem>>, vector<8x128xf32>,
    } else {
    }
    %c0 = arith.constant 0 : index
    %c0_1 = arith.constant 0 : index
    %3 = vector.load %arg2[%c0, %c0_1] : memref<16x128xf32, #tpu.memory_space<vmem>>, vector<16x128xf32>
    %c0_2 = arith.constant 0 : index
    %c0_3 = arith.constant 0 : index
    %4 = vector.load %arg3[%c0_2, %c0_3] : memref<16x128xf32, #tpu.memory_space<vmem>>, vector<16x128xf32>
    %5 = math.absf %3 : vector<16x128xf32>
    %cst = arith.constant 0.000000e+00 : f32
    %6 = vector.broadcast %cst : f32 to vector<16x128xf32>
    %7 = arith.subf %6, %5 : vector<16x128xf32>
    %8 = math.exp %7 : vector<16x128xf32>
    %cst_4 = arith.constant 0.000000e+00 : f32
    %9 = vector.broadcast %cst_4 : f32 to vector<16x128xf32>
    %10 = arith.maximumf %3, %9 : vector<16x128xf32>
    %11 = arith.mulf %3, %4 : vector<16x128xf32>
    %12 = arith.subf %10, %11 : vector<16x128xf32>
    %13 = math.log1p %8 : vector<16x128xf32>
    %14 = arith.addf %12, %13 : vector<16x128xf32>
    %cst_5 = arith.constant 1.000000e+00 : f32
    %15 = vector.broadcast %cst_5 : f32 to vector<16x128xf32>
    %16 = arith.addf %15, %8 : vector<16x128xf32>
    %17 = tpu.reciprocal %16 {approx = true} : vector<16x128xf32> -> vector<16x128xf32>
    %18 = arith.mulf %16, %17 : vector<16x128xf32>
    %cst_6 = arith.constant 2.000000e+00 : f32
    %19 = vector.broadcast %cst_6 : f32 to vector<16x128xf32>
    %20 = arith.subf %19, %18 : vector<16x128xf32>
    %21 = arith.mulf %17, %20 : vector<16x128xf32>
    %cst_7 = arith.constant 0.000000e+00 : f32
    %22 = vector.broadcast %cst_7 : f32 to vector<16x128xf32>
    %23 = arith.cmpf oge, %3, %22 : vector<16x128xf32>
    %24 = arith.mulf %8, %21 : vector<16x128xf32>
    %25 = arith.select %23, %21, %24 : vector<16x128xi1>, vector<16x128xf32>
    %26 = arith.addf %25, %4 : vector<16x128xf32>
    %cst_8 = arith.constant 2.000000e+00 : f32
    %27 = vector.broadcast %cst_8 : f32 to vector<16x128xf32>
    %28 = arith.mulf %27, %25 : vector<16x128xf32>
    %29 = arith.mulf %28, %4 : vector<16x128xf32>
    %30 = arith.subf %26, %29 : vector<16x128xf32>
    %cst_9 = arith.constant -5.000000e-01 : f32
    %31 = vector.broadcast %cst_9 : f32 to vector<16x128xf32>
    %32 = arith.mulf %31, %4 : vector<16x128xf32>
    %cst_10 = arith.constant 7.500000e-01 : f32
    %33 = vector.broadcast %cst_10 : f32 to vector<16x128xf32>
    %34 = arith.addf %33, %32 : vector<16x128xf32>
    %35 = arith.mulf %30, %30 : vector<16x128xf32>
    %36 = arith.mulf %34, %35 : vector<16x128xf32>
    %c0_11 = arith.constant 0 : index
    %c0_12 = arith.constant 0 : index
    %37 = vector.load %arg4[%c0_11, %c0_12] : memref<8x128xf32, #tpu.memory_space<vmem>>, vector<8x128xf32>
    %38 = vector.shape_cast %14 : vector<16x128xf32> to vector<2x8x128xf32>
    %cst_13 = arith.constant dense<0.000000e+00> : vector<8x128xf32>
    %39 = vector.multi_reduction <add>, %38, %cst_13 [0] : vector<2x8x128xf32> to vector<8x128xf32>
    %40 = arith.addf %37, %39 : vector<8x128xf32>
    %c0_14 = arith.constant 0 : index
    %c0_15 = arith.constant 0 : index
    %41 = vector.load %arg4[%c0_14, %c0_15] : memref<8x128xf32, #tpu.memory_space<vmem>>, vector<8x128xf32>
    tpu.vector_store %arg4[%c0_14, %c0_15], %40 {strides = array<i32>} : memref<8x128xf32, #tpu.memory_space<vmem>>, vector<8x128xf32>,
    %c0_16 = arith.constant 0 : index
    %c0_17 = arith.constant 0 : index
    %42 = vector.load %arg5[%c0_16, %c0_17] : memref<8x128xf32, #tpu.memory_space<vmem>>, vector<8x128xf32>
    %43 = vector.shape_cast %36 : vector<16x128xf32> to vector<2x8x128xf32>
    %cst_18 = arith.constant dense<0.000000e+00> : vector<8x128xf32>
    %44 = vector.multi_reduction <add>, %43, %cst_18 [0] : vector<2x8x128xf32> to vector<8x128xf32>
    %45 = arith.addf %42, %44 : vector<8x128xf32>
    %c0_19 = arith.constant 0 : index
    %c0_20 = arith.constant 0 : index
    %46 = vector.load %arg5[%c0_19, %c0_20] : memref<8x128xf32, #tpu.memory_space<vmem>>, vector<8x128xf32>
    tpu.vector_store %arg5[%c0_19, %c0_20], %45 {strides = array<i32>} : memref<8x128xf32, #tpu.memory_space<vmem>>, vector<8x128xf32>,
    return
  }
  func.func @transform_0(%arg0: i32, %arg1: i32) -> (i32, i32) {
    %c1_i32 = arith.constant 1 : i32
    %0 = arith.muli %arg1, %c1_i32 : i32
    %1 = arith.addi %0, %arg0 : i32
    %c0_i32 = arith.constant 0 : i32
    %c0_i32_0 = arith.constant 0 : i32
    return %1, %c0_i32 : i32, i32
  }
  func.func @transform_1(%arg0: i32, %arg1: i32) -> (i32, i32) {
    %c1_i32 = arith.constant 1 : i32
    %0 = arith.muli %arg1, %c1_i32 : i32
    %1 = arith.addi %0, %arg0 : i32
    %c0_i32 = arith.constant 0 : i32
    %c0_i32_0 = arith.constant 0 : i32
    return %1, %c0_i32 : i32, i32
  }
  func.func @transform_2(%arg0: i32, %arg1: i32) -> (i32, i32) {
    %c0_i32 = arith.constant 0 : i32
    %c0_i32_0 = arith.constant 0 : i32
    return %arg0, %c0_i32 : i32, i32
  }
  func.func @transform_3(%arg0: i32, %arg1: i32) -> (i32, i32) {
    %c0_i32 = arith.constant 0 : i32
    %c0_i32_0 = arith.constant 0 : i32
    return %arg0, %c0_i32 : i32, i32
  }
}

</mosaic_0001>

<llo_original>
// kernel: tpu_custom_call.1
$region0: #{tpu_custom_call.1}
  #allocation0 [shape = 'u32[]', space=smem, size = 0x4, offset = 0x4, fixed_abs, tag = 'smem constant byte address 0x4 - core index']
  #allocation1 [shape = 'u32[144,128]{1,0:T(1,128)}', space=vmem, size = 0x12000, scoped, tag = 'internal scratch']
  %s0 = inlined_call_operand.hbm [shape: f32[16,128], index: 0, kind: input, shape index: {}]
  %s1 = inlined_call_operand.hbm [shape: f32[16,128], index: 1, kind: input, shape index: {}]
  %s2 = inlined_call_operand.hbm [shape: f32[8,128], index: 2, kind: output, shape index: {0}]
  %s3 = inlined_call_operand.hbm [shape: f32[8,128], index: 3, kind: output, shape index: {1}]
  %4 = xla_tuple %s2, %s3
  %s5 = sld [smem:[#allocation0]]
  $region38: #{tpu_custom_call.1} parent=0
    _
  %s7 = ssub.s32 1, %s5
  %s8 = scalar_select 0, %s7, %s5
  $region1: #{tpu_custom_call.1} parent=0
    #allocation2 [shape = 'u8[8192]{0}', space=vmem, size = 0x2000, scoped, tag = 'input window, operand 0, single buffered']
    #allocation3 [shape = 's32[1]{0}', space=sflag, size = 0x4, scoped, tag = 'scoped memory for tpu_custom_call.1']
    #allocation4 [shape = 's32[1]{0}', space=sflag, size = 0x4, scoped, tag = 'scoped memory for tpu_custom_call.1']
    #allocation5 [shape = 'u8[8192]{0}', space=vmem, size = 0x2000, scoped, tag = 'input window, operand 1, single buffered']
    #allocation6 [shape = 's32[1]{0}', space=sflag, size = 0x4, scoped, tag = 'scoped memory for tpu_custom_call.1']
    #allocation7 [shape = 'u8[4096]{0}', space=vmem, size = 0x1000, scoped, tag = 'output window, operand 0, single buffered']
    #allocation8 [shape = 'u8[4096]{0}', space=vmem, size = 0x1000, scoped, tag = 'output window, operand 1, single buffered']
    #allocation9 [shape = 's32[1]{0}', space=sflag, size = 0x4, scoped, tag = 'scoped memory for tpu_custom_call.1']
    %9 = vsyncpa [#allocation3], 0
    %10 = vsyncpa [#allocation6], 0
    %11 = vsyncpa [#allocation4], 0
    %12 = vsyncpa [#allocation9], 0
    // Predicated region
    $region2: #{tpu_custom_call.1} parent=1 // pred_check
      _
    $region3: #{tpu_custom_call.1} parent=1 // pred_check_branch
      %14 = sbr.rel (0) target = $region5
    $region4: #{tpu_custom_call.1} parent=1 // pred_region
      %s15 = sadd.s32 0, 0
      %s16 = smul.u32 2, %s15
      %s18 = ssub.s32 256, 256
      %19 = vsyncadd [#allocation3], %s18
      %s20 = smul.addr %s16, 128
      %s21 = scalar_lea.hbm %s0, %s20
      %s22 = sshll.u32 [#allocation2], 4
      %s23 = int_to_ptr.vmem [resolvable:$true] %s22
      %28 = dma.hbm_to_vmem [thread:$0]  %s21, 256, %s23, [#allocation3], 128, 128, 8
    $region5: #{tpu_custom_call.1} parent=1 // pred_fallthru
      _
    // Predicated region
    $region6: #{tpu_custom_call.1} parent=1 // pred_check
      _
    $region7: #{tpu_custom_call.1} parent=1 // pred_check_branch
      %30 = sbr.rel (0) target = $region9
    $region8: #{tpu_custom_call.1} parent=1 // pred_region
      %s31 = sadd.s32 0, 0
      %s32 = smul.u32 2, %s31
      %s34 = ssub.s32 256, 256
      %35 = vsyncadd [#allocation6], %s34
      %s36 = smul.addr %s32, 128
      %s37 = scalar_lea.hbm %s1, %s36
      %s38 = sshll.u32 [#allocation5], 4
      %s39 = int_to_ptr.vmem [resolvable:$true] %s38
      %44 = dma.hbm_to_vmem [thread:$0]  %s37, 256, %s39, [#allocation6], 128, 128, 8
    $region9: #{tpu_custom_call.1} parent=1 // pred_fallthru
      _
    // Predicated region
    $region10: #{tpu_custom_call.1} parent=1 // pred_check
      _
    $region11: #{tpu_custom_call.1} parent=1 // pred_check_branch
      %46 = sbr.rel (0) target = $region13
    $region12: #{tpu_custom_call.1} parent=1 // pred_region
      %47 = dma.done [#allocation3], 256
    $region13: #{tpu_custom_call.1} parent=1 // pred_fallthru
      _
    // Predicated region
    $region14: #{tpu_custom_call.1} parent=1 // pred_check
      _
    $region15: #{tpu_custom_call.1} parent=1 // pred_check_branch
      %49 = sbr.rel (0) target = $region17
    $region16: #{tpu_custom_call.1} parent=1 // pred_region
      %50 = dma.done [#allocation6], 256
    $region17: #{tpu_custom_call.1} parent=1 // pred_fallthru
      _
    %s51 = sadd.s32 0, 0
    %s52 = smul.u32 2, %s51
    %s53 = sadd.s32 0, 0
    %s54 = smul.u32 2, %s53
    %p55 = scmp.eq.s32.totalorder 0, 0
    // Predicated region
    $region18: #{tpu_custom_call.1} parent=1 // pred_check
      %p56 = pneg %p55
    $region19: #{tpu_custom_call.1} parent=1 // pred_check_branch
      %58 = sbr.rel (%p56) target = $region21
    $region20: #{tpu_custom_call.1} parent=1 // pred_region
      %59 = vst [vmem:[#allocation7] sm:$0xff] 0.0
      %60 = vst [vmem:[#allocation8] sm:$0xff] 0.0
    $region21: #{tpu_custom_call.1} parent=1 // pred_fallthru
      _
    %v61 = vld [vmem:[#allocation2] sm:$0xff]
    %v62 = vld [vmem:[#allocation2 + $0x8] sm:$0xff]
    %v63 = vld [vmem:[#allocation5] sm:$0xff]
    %v64 = vld [vmem:[#allocation5 + $0x8] sm:$0xff]
    %v65 = vand.u32 2147483647, %v61
    %v66 = vand.u32 2147483647, %v62
    %v67 = vsub.f32 0.0, %v65
    %v68 = vsub.f32 0.0, %v66
    %v69 = vmul.f32 %v67, 1.442695
    %v70 = vpow.pop %v69
    %v71 = vmul.f32 %v68, 1.442695
    %v72 = vpow.pop %v71
    %v73 = vmax.f32 %v61, 0.0
    %v74 = vmax.f32 %v62, 0.0
    %v75 = vmul.f32 %v61, %v63
    %v76 = vmul.f32 %v62, %v64
    %v77 = vsub.f32 %v73, %v75
    %v78 = vsub.f32 %v74, %v76
    %v79 = vadd.f32 %v70, 1.0
    %v80 = vlog2.pop %v79
    %v81 = vmul.f32 %v80, 0.6931472
    %v82 = vmul.f32 -0.5, %v70
    %v83 = vadd.f32 %v82, 1.0
    %v84 = vmul.f32 %v83, %v70
    %v85 = vand.u32 2147483647, %v70
    %vm86 = vcmp.lt.f32.partialorder %v85, 0.0004427343
    %v87 = vsel %vm86, %v84, %v81
    %v88 = vadd.f32 %v72, 1.0
    %v89 = vlog2.pop %v88
    %v90 = vmul.f32 %v89, 0.6931472
    %v91 = vmul.f32 -0.5, %v72
    %v92 = vadd.f32 %v91, 1.0
    %v93 = vmul.f32 %v92, %v72
    %v94 = vand.u32 2147483647, %v72
    %vm95 = vcmp.lt.f32.partialorder %v94, 0.0004427343
    %v96 = vsel %vm95, %v93, %v90
    %v97 = vadd.f32 %v77, %v87
    %v98 = vadd.f32 %v78, %v96
    %v99 = vadd.f32 %v70, 1.0
    %v100 = vadd.f32 %v72, 1.0
    %v101 = vrcp.pop %v99
    %v102 = vrcp.pop %v100
    %v103 = vmul.f32 %v99, %v101
    %v104 = vmul.f32 %v100, %v102
    %v105 = vsub.f32 2.0, %v103
    %v106 = vsub.f32 2.0, %v104
    %v107 = vmul.f32 %v101, %v105
    %v108 = vmul.f32 %v102, %v106
    %vm109 = vcmp.ge.f32.partialorder %v61, 0.0
    %vm110 = vcmp.ge.f32.partialorder %v62, 0.0
    %v111 = vmul.f32 %v70, %v107
    %v112 = vmul.f32 %v72, %v108
    %v113 = vsel %vm109, %v107, %v111
    %v114 = vsel %vm110, %v108, %v112
    %v115 = vadd.f32 %v113, %v63
    %v116 = vadd.f32 %v114, %v64
    %v117 = vmul.f32 %v113, 2.0
    %v118 = vmul.f32 %v114, 2.0
    %v119 = vmul.f32 %v117, %v63
    %v120 = vmul.f32 %v118, %v64
    %v121 = vsub.f32 %v115, %v119
    %v122 = vsub.f32 %v116, %v120
    %v123 = vmul.f32 %v63, -0.5
    %v124 = vmul.f32 %v64, -0.5
    %v125 = vadd.f32 %v123, 0.75
    %v126 = vadd.f32 %v124, 0.75
    %v127 = vmul.f32 %v121, %v121
    %v128 = vmul.f32 %v122, %v122
    %v129 = vmul.f32 %v125, %v127
    %v130 = vmul.f32 %v126, %v128
    %v131 = vld [vmem:[#allocation7] sm:$0xff]
    %v132 = vadd.f32 %v97, %v98
    %v133 = vadd.f32 %v131, %v132
    %134 = vst [vmem:[#allocation7] sm:$0xff] %v133
    %v135 = vld [vmem:[#allocation8] sm:$0xff]
    %v136 = vadd.f32 %v129, %v130
    %v137 = vadd.f32 %v135, %v136
    %138 = vst [vmem:[#allocation8] sm:$0xff] %v137
    // Predicated region
    $region22: #{tpu_custom_call.1} parent=1 // pred_check
      _
    $region23: #{tpu_custom_call.1} parent=1 // pred_check_branch
      %140 = sbr.rel (0) target = $region25
    $region24: #{tpu_custom_call.1} parent=1 // pred_region
      %s142 = ssub.s32 128, 128
      %143 = vsyncadd [#allocation4], %s142
      %s145 = sshll.u32 [#allocation7], 4
      %s146 = int_to_ptr.vmem [resolvable:$true] %s145
      %148 = dma.vmem_to_hbm [thread:$0]  %s146, 128, %s2, [#allocation4]
    $region25: #{tpu_custom_call.1} parent=1 // pred_fallthru
      _
    // Predicated region
    $region26: #{tpu_custom_call.1} parent=1 // pred_check
      _
    $region27: #{tpu_custom_call.1} parent=1 // pred_check_branch
      %150 = sbr.rel (0) target = $region29
    $region28: #{tpu_custom_call.1} parent=1 // pred_region
      %s152 = ssub.s32 128, 128
      %153 = vsyncadd [#allocation9], %s152
      %s155 = sshll.u32 [#allocation8], 4
      %s156 = int_to_ptr.vmem [resolvable:$true] %s155
      %158 = dma.vmem_to_hbm [thread:$0]  %s156, 128, %s3, [#allocation9]
    $region29: #{tpu_custom_call.1} parent=1 // pred_fallthru
      _
    // Predicated region
    $region30: #{tpu_custom_call.1} parent=1 // pred_check
      _
    $region31: #{tpu_custom_call.1} parent=1 // pred_check_branch
      %160 = sbr.rel (0) target = $region33
    $region32: #{tpu_custom_call.1} parent=1 // pred_region
      %161 = dma.done [#allocation4], 128
    $region33: #{tpu_custom_call.1} parent=1 // pred_fallthru
      _
    // Predicated region
    $region34: #{tpu_custom_call.1} parent=1 // pred_check
      _
    $region35: #{tpu_custom_call.1} parent=1 // pred_check_branch
      %163 = sbr.rel (0) target = $region37
    $region36: #{tpu_custom_call.1} parent=1 // pred_region
      %164 = dma.done [#allocation9], 128
    $region37: #{tpu_custom_call.1} parent=1 // pred_fallthru
      _
    %165 = vsyncpa [#allocation3], 1
    %166 = vsyncpa [#allocation6], 1
    %167 = vsyncpa [#allocation4], 1
    %168 = vsyncpa [#allocation9], 1

</llo_original>
